<compile_context>
chip_gen: v5e
topology: v5e:2x2
jax: 0.10.0
libtpu: 0.0.40
codegen_flags: <defaults>
</compile_context>

<pallas_src>
import jax
import jax.numpy as jnp
from jax.experimental import pallas as pl
from jax.experimental.pallas import tpu as pltpu

LANES = 128
F_IN, HID, F_OUT = 10, 32, 10

# Packed-parameter layout inside a single (PACK_ROWS, 128) bf16 block:
#   row 0: b1 (padded to 128 lanes), row 1: b2, row 2: b3, rows 3..7: zero padding,
#   rows   8..135 : W1 zero-padded to (128, 128)  (real data in [0:10, 0:32])
#   rows 136..263 : W2 zero-padded to (128, 128)  (real data in [0:32, 0:32])
#   rows 264..391 : W3 zero-padded to (128, 128)  (real data in [0:32, 0:10])
_B1_ROW, _B2_ROW, _B3_ROW = 0, 1, 2
_W1_OFF = 8
_W2_OFF = 8 + LANES
_W3_OFF = 8 + 2 * LANES
PACK_ROWS = 8 + 3 * LANES  # 392 (multiple of 8)


def mlp_kernel(x_ref, p_ref, o_ref, xpad_ref):
    # Zero-pad the (TB, 10) input tile to 128 lanes inside VMEM.  Re-zeroed every step so
    # there is no cross-iteration scratch state (safe under "parallel" megacore splitting).
    xpad_ref[...] = jnp.zeros_like(xpad_ref)
    xpad_ref[:, :F_IN] = x_ref[...]                 # masked lane store of the 10 real columns
    x = xpad_ref[...].astype(jnp.bfloat16)          # (TB, 128) bf16, lanes >= 10 exactly zero

    b1 = p_ref[_B1_ROW:_B1_ROW + 1, :].astype(jnp.float32)   # (1, 128)
    b2 = p_ref[_B2_ROW:_B2_ROW + 1, :].astype(jnp.float32)
    b3 = p_ref[_B3_ROW:_B3_ROW + 1, :].astype(jnp.float32)
    w1 = p_ref[_W1_OFF:_W1_OFF + LANES, :]          # (128, 128) bf16, zero-padded
    w2 = p_ref[_W2_OFF:_W2_OFF + LANES, :]
    w3 = p_ref[_W3_OFF:_W3_OFF + LANES, :]

    # layer1: Linear(10 -> 32) + ReLU   (zero padding keeps lanes >= 32 exactly zero)
    h1 = jnp.maximum(jnp.dot(x, w1, preferred_element_type=jnp.float32) + b1, 0.0)
    # layer2: Linear(32 -> 32) + ReLU
    h2 = jnp.maximum(
        jnp.dot(h1.astype(jnp.bfloat16), w2, preferred_element_type=jnp.float32) + b2, 0.0)
    # layer4: Linear(32 -> 10)
    logits = jnp.dot(h2.astype(jnp.bfloat16), w3, preferred_element_type=jnp.float32) + b3
    # sigmoid only on the 10 real output lanes: exp (EUP) + approx reciprocal (EUP slot, free)
    z = logits[:, :F_OUT]                           # (TB, 10)
    o_ref[...] = pl.reciprocal(1.0 + jnp.exp(-z), approx=True)


def pack_params(params):
    """Pack (w1, b1, w2, b2, w3, b3) into a single lane-padded (392, 128) bf16 block."""
    w1, b1, w2, b2, w3, b3 = params
    p = jnp.zeros((PACK_ROWS, LANES), jnp.float32)
    p = p.at[_B1_ROW, :HID].set(b1.reshape(-1).astype(jnp.float32))
    p = p.at[_B2_ROW, :HID].set(b2.reshape(-1).astype(jnp.float32))
    p = p.at[_B3_ROW, :F_OUT].set(b3.reshape(-1).astype(jnp.float32))
    p = p.at[_W1_OFF:_W1_OFF + F_IN, :HID].set(w1.astype(jnp.float32))
    p = p.at[_W2_OFF:_W2_OFF + HID, :HID].set(w2.astype(jnp.float32))
    p = p.at[_W3_OFF:_W3_OFF + HID, :F_OUT].set(w3.astype(jnp.float32))
    return p.astype(jnp.bfloat16)


def _cdiv(a, b):
    return -(-a // b)


def _round_up(n, m):
    return ((n + m - 1) // m) * m


@jax.jit
def fully_connected_forward(x, packed_params):
    B = x.shape[0]

    # Batch tile: target 2048 rows (amortizes ~0.35us/step overhead, stays under every
    # generation's default scoped VMEM), but re-balance so non-multiple batches do not pad
    # up by a whole extra tile (e.g. B=3000 -> TB=1504, nb=2 instead of padding to 4096).
    TB_TARGET = 2048
    nb_target = max(1, _cdiv(B, TB_TARGET))
    TB = _round_up(_cdiv(B, nb_target), 8)
    nb = _cdiv(B, TB)
    B_pad = nb * TB

    xf = x.astype(jnp.float32)
    if B_pad != B:
        xf = jnp.pad(xf, ((0, B_pad - B), (0, 0)))   # batch-pad only; no lane padding in HBM

    cost = pl.CostEstimate(
        flops=2 * B_pad * (F_IN * HID + HID * HID + HID * F_OUT),
        transcendentals=B_pad * F_OUT,
        bytes_accessed=B_pad * F_IN * 4 + B_pad * F_OUT * 4 + PACK_ROWS * LANES * 2,
    )

    out = pl.pallas_call(
        mlp_kernel,
        out_shape=jax.ShapeDtypeStruct((B_pad, F_OUT), jnp.float32),
        grid=(nb,),
        in_specs=[
            pl.BlockSpec((TB, F_IN), lambda i: (i, 0)),          # x: narrow, batch-tiled
            pl.BlockSpec((PACK_ROWS, LANES), lambda i: (0, 0)),  # params: VMEM-resident
        ],
        out_specs=pl.BlockSpec((TB, F_OUT), lambda i: (i, 0)),   # narrow output block
        scratch_shapes=[pltpu.VMEM((TB, LANES), jnp.float32)],   # in-kernel lane-pad buffer
        compiler_params=pltpu.CompilerParams(
            dimension_semantics=("parallel",)),                  # megacore sharding on v7x
        cost_estimate=cost,
    )(xf, packed_params)

    return out[:B] if B_pad != B else out


def init_params(key):
    """Deterministic init mimicking nn.Linear's uniform(-1/sqrt(fan_in), 1/sqrt(fan_in)).

    Weights are stored transposed (in_features, out_features) so the kernel computes x @ W + b.
    """
    dims = [(F_IN, HID), (HID, HID), (HID, F_OUT)]
    params = []
    for fan_in, fan_out in dims:
        key, kw, kb = jax.random.split(key, 3)
        bound = 1.0 / jnp.sqrt(float(fan_in))
        w = jax.random.uniform(kw, (fan_in, fan_out), jnp.float32, -bound, bound)
        b = jax.random.uniform(kb, (1, fan_out), jnp.float32, -bound, bound)
        params += [w, b]
    return tuple(params)


def reference_forward(x, params):
    w1, b1, w2, b2, w3, b3 = params
    h1 = jnp.maximum(x @ w1 + b1, 0.0)
    h2 = jnp.maximum(h1 @ w2 + b2, 0.0)
    return jax.nn.sigmoid(h2 @ w3 + b3)


if __name__ == "__main__":
    key = jax.random.PRNGKey(0)
    key, kx = jax.random.split(key)

    batch = 8
    x = jax.random.normal(kx, (batch, F_IN), dtype=jnp.float32)
    params = init_params(key)
    packed = pack_params(params)

    out = jax.block_until_ready(fully_connected_forward(x, packed))
    ref = reference_forward(x, params)
    assert out.shape == (batch, F_OUT)
    # bf16 MXU operands + approx reciprocal => relaxed tolerance vs. the f32 reference.
    assert jnp.allclose(out, ref, atol=1e-2, rtol=0.0)

    # Larger, non-tile-multiple batch: exercises the batch grid, pipelining and row padding.
    key, kx2 = jax.random.split(key)
    x_big = jax.random.normal(kx2, (3000, F_IN), dtype=jnp.float32)
    out_big = jax.block_until_ready(fully_connected_forward(x_big, packed))
    ref_big = reference_forward(x_big, params)
    assert out_big.shape == (3000, F_OUT)
    assert jnp.allclose(out_big, ref_big, atol=1e-2, rtol=0.0)

    print("KERNEL_OK")
</pallas_src>

<mosaic_0001>
module attributes {stable_mosaic.version = 11 : i64} {
  func.func @mlp_kernel(%arg0: i32, %arg1: memref<8x10xf32, #tpu.memory_space<vmem>>, %arg2: memref<392x128xbf16, #tpu.memory_space<vmem>>, %arg3: memref<8x10xf32, #tpu.memory_space<vmem>>, %arg4: memref<8x128xf32, #tpu.memory_space<vmem>>) attributes {dimension_semantics = [#tpu.dimension_semantics<parallel>], iteration_bounds = array<i64: 1>, scalar_prefetch = 0 : i64, scratch_operands = 1 : i64, tpu.core_type = #tpu.core_type<tc>, window_params = [{transform_indices = @transform_0, window_bounds = array<i64: 8, 10>}, {pipeline_mode = #tpu.pipeline_mode<synchronous>, transform_indices = @transform_1, window_bounds = array<i64: 392, 128>}, {transform_indices = @transform_2, window_bounds = array<i64: 8, 10>}]} {
    %cst = arith.constant 0.000000e+00 : f32
    %0 = vector.broadcast %cst : f32 to vector<8x128xf32>
    %c0 = arith.constant 0 : index
    %c0_0 = arith.constant 0 : index
    %1 = vector.load %arg4[%c0, %c0_0] : memref<8x128xf32, #tpu.memory_space<vmem>>, vector<8x128xf32>
    tpu.vector_store %arg4[%c0, %c0_0], %0 {strides = array<i32>} : memref<8x128xf32, #tpu.memory_space<vmem>>, vector<8x128xf32>,
    %c0_1 = arith.constant 0 : index
    %c0_2 = arith.constant 0 : index
    %2 = vector.load %arg1[%c0_1, %c0_2] : memref<8x10xf32, #tpu.memory_space<vmem>>, vector<8x10xf32>
    %c0_3 = arith.constant 0 : index
    %c0_4 = arith.constant 0 : index
    %3 = vector.load %arg4[%c0_3, %c0_4] : memref<8x128xf32, #tpu.memory_space<vmem>>, vector<8x10xf32>
    tpu.vector_store %arg4[%c0_3, %c0_4], %2 {strides = array<i32>} : memref<8x128xf32, #tpu.memory_space<vmem>>, vector<8x10xf32>,
    %c0_5 = arith.constant 0 : index
    %c0_6 = arith.constant 0 : index
    %4 = vector.load %arg4[%c0_5, %c0_6] : memref<8x128xf32, #tpu.memory_space<vmem>>, vector<8x128xf32>
    %5 = arith.truncf %4 : vector<8x128xf32> to vector<8x128xbf16>
    %c0_7 = arith.constant 0 : index
    %c0_8 = arith.constant 0 : index
    %6 = vector.load %arg2[%c0_7, %c0_8] : memref<392x128xbf16, #tpu.memory_space<vmem>>, vector<1x128xbf16>
    %7 = arith.extf %6 : vector<1x128xbf16> to vector<1x128xf32>
    %c1 = arith.constant 1 : index
    %c0_9 = arith.constant 0 : index
    %8 = vector.load %arg2[%c1, %c0_9] : memref<392x128xbf16, #tpu.memory_space<vmem>>, vector<1x128xbf16>
    %9 = arith.extf %8 : vector<1x128xbf16> to vector<1x128xf32>
    %c2 = arith.constant 2 : index
    %c0_10 = arith.constant 0 : index
    %10 = vector.load %arg2[%c2, %c0_10] : memref<392x128xbf16, #tpu.memory_space<vmem>>, vector<1x128xbf16>
    %11 = arith.extf %10 : vector<1x128xbf16> to vector<1x128xf32>
    %c8 = arith.constant 8 : index
    %c0_11 = arith.constant 0 : index
    %12 = vector.load %arg2[%c8, %c0_11] : memref<392x128xbf16, #tpu.memory_space<vmem>>, vector<128x128xbf16>
    %c136 = arith.constant 136 : index
    %c0_12 = arith.constant 0 : index
    %13 = vector.load %arg2[%c136, %c0_12] : memref<392x128xbf16, #tpu.memory_space<vmem>>, vector<128x128xbf16>
    %c264 = arith.constant 264 : index
    %c0_13 = arith.constant 0 : index
    %14 = vector.load %arg2[%c264, %c0_13] : memref<392x128xbf16, #tpu.memory_space<vmem>>, vector<128x128xbf16>
    %cst_14 = arith.constant dense<0.000000e+00> : vector<8x128xf32>
    %15 = tpu.matmul %5, %12, %cst_14 {dimension_numbers = #tpu.dot_dimension_numbers<[1], [0], [0], [1], [0, 0, 1, 1], [], []>} : vector<8x128xbf16>, vector<128x128xbf16>, vector<8x128xf32> -> vector<8x128xf32>
    %16 = vector.broadcast %7 : vector<1x128xf32> to vector<8x128xf32>
    %17 = arith.addf %15, %16 : vector<8x128xf32>
    %cst_15 = arith.constant 0.000000e+00 : f32
    %18 = vector.broadcast %cst_15 : f32 to vector<8x128xf32>
    %19 = arith.maximumf %17, %18 : vector<8x128xf32>
    %20 = arith.truncf %19 : vector<8x128xf32> to vector<8x128xbf16>
    %cst_16 = arith.constant dense<0.000000e+00> : vector<8x128xf32>
    %21 = tpu.matmul %20, %13, %cst_16 {dimension_numbers = #tpu.dot_dimension_numbers<[1], [0], [0], [1], [0, 0, 1, 1], [], []>} : vector<8x128xbf16>, vector<128x128xbf16>, vector<8x128xf32> -> vector<8x128xf32>
    %22 = vector.broadcast %9 : vector<1x128xf32> to vector<8x128xf32>
    %23 = arith.addf %21, %22 : vector<8x128xf32>
    %cst_17 = arith.constant 0.000000e+00 : f32
    %24 = vector.broadcast %cst_17 : f32 to vector<8x128xf32>
    %25 = arith.maximumf %23, %24 : vector<8x128xf32>
    %26 = arith.truncf %25 : vector<8x128xf32> to vector<8x128xbf16>
    %cst_18 = arith.constant dense<0.000000e+00> : vector<8x128xf32>
    %27 = tpu.matmul %26, %14, %cst_18 {dimension_numbers = #tpu.dot_dimension_numbers<[1], [0], [0], [1], [0, 0, 1, 1], [], []>} : vector<8x128xbf16>, vector<128x128xbf16>, vector<8x128xf32> -> vector<8x128xf32>
    %28 = vector.broadcast %11 : vector<1x128xf32> to vector<8x128xf32>
    %29 = arith.addf %27, %28 : vector<8x128xf32>
    %30 = vector.extract_strided_slice %29 {offsets = [0, 0], sizes = [8, 10], strides = [1, 1]} : vector<8x128xf32> to vector<8x10xf32>
    %cst_19 = arith.constant 0.000000e+00 : f32
    %31 = vector.broadcast %cst_19 : f32 to vector<8x10xf32>
    %32 = arith.subf %31, %30 : vector<8x10xf32>
    %33 = math.exp %32 : vector<8x10xf32>
    %cst_20 = arith.constant 1.000000e+00 : f32
    %34 = vector.broadcast %cst_20 : f32 to vector<8x10xf32>
    %35 = arith.addf %34, %33 : vector<8x10xf32>
    %36 = tpu.reciprocal %35 {approx = true} : vector<8x10xf32> -> vector<8x10xf32>
    %c0_21 = arith.constant 0 : index
    %c0_22 = arith.constant 0 : index
    %37 = vector.load %arg3[%c0_21, %c0_22] : memref<8x10xf32, #tpu.memory_space<vmem>>, vector<8x10xf32>
    tpu.vector_store %arg3[%c0_21, %c0_22], %36 {strides = array<i32>} : memref<8x10xf32, #tpu.memory_space<vmem>>, vector<8x10xf32>,
    return
  }
  func.func @transform_0(%arg0: i32) -> (i32, i32) {
    %c0_i32 = arith.constant 0 : i32
    %c0_i32_0 = arith.constant 0 : i32
    return %arg0, %c0_i32 : i32, i32
  }
  func.func @transform_1(%arg0: i32) -> (i32, i32) {
    %c0_i32 = arith.constant 0 : i32
    %c0_i32_0 = arith.constant 0 : i32
    %c0_i32_1 = arith.constant 0 : i32
    return %c0_i32, %c0_i32_0 : i32, i32
  }
  func.func @transform_2(%arg0: i32) -> (i32, i32) {
    %c0_i32 = arith.constant 0 : i32
    %c0_i32_0 = arith.constant 0 : i32
    return %arg0, %c0_i32 : i32, i32
  }
}

</mosaic_0001>

<llo_original>
// kernel: fully_connected_forward.1
$region0: #{fully_connected_forward.1}
  #allocation0 [shape = 'u32[]', space=smem, size = 0x4, offset = 0x4, fixed_abs, tag = 'smem constant byte address 0x4 - core index']
  #allocation1 [shape = 'u32[72,128]{1,0:T(1,128)}', space=vmem, size = 0x9000, scoped, tag = 'internal scratch']
  #allocation2 [shape = 'f32[8,128]{1,0:T(8,128)}', space=vmem, size = 0x1000, scoped, tag = 'scratch operand']
  %s0 = inlined_call_operand.hbm [shape: f32[8,10], index: 0, kind: input, shape index: {}]
  %s1 = inlined_call_operand.hbm [shape: bf16[392,128], index: 1, kind: input, shape index: {}]
  %s2 = inlined_call_operand.hbm [shape: f32[8,10], index: 2, kind: output, shape index: {}]
  %s3 = sld [smem:[#allocation0]]
  $region26: #{fully_connected_forward.1} parent=0
    _
  %s5 = ssub.s32 1, %s3
  %s6 = scalar_select 0, %s5, %s3
  $region1: #{fully_connected_forward.1} parent=0
    #allocation3 [shape = 'u8[4096]{0}', space=vmem, size = 0x1000, scoped, tag = 'input window, operand 0, single buffered']
    #allocation4 [shape = 's32[1]{0}', space=sflag, size = 0x4, scoped, tag = 'scoped memory for fully_connected_forward.1']
    #allocation5 [shape = 's32[1]{0}', space=sflag, size = 0x4, scoped, tag = 'scoped memory for fully_connected_forward.1']
    #allocation6 [shape = 'u8[100352]{0}', space=vmem, size = 0x18800, scoped, tag = 'input window, operand 1, single buffered']
    #allocation7 [shape = 's32[1]{0}', space=sflag, size = 0x4, scoped, tag = 'scoped memory for fully_connected_forward.1']
    #allocation8 [shape = 'u8[4096]{0}', space=vmem, size = 0x1000, scoped, tag = 'output window, operand 0, single buffered']
    %7 = vsyncpa [#allocation4], 0
    %8 = vsyncpa [#allocation7], 0
    %9 = vsyncpa [#allocation5], 0
    // Predicated region
    $region2: #{fully_connected_forward.1} parent=1 // pred_check
      _
    $region3: #{fully_connected_forward.1} parent=1 // pred_check_branch
      %11 = sbr.rel (0) target = $region5
    $region4: #{fully_connected_forward.1} parent=1 // pred_region
      %13 = vsyncadd [#allocation4], 0
      %s15 = sshll.u32 %s0, 4
      %s16 = int_to_ptr.hbm [resolvable:$true] %s15
      %s17 = sshll.u32 [#allocation3], 4
      %s18 = int_to_ptr.vmem [resolvable:$true] %s17
      %20 = dma.hbm_to_vmem [thread:$0]  %s16, 128, %s18, [#allocation4]
    $region5: #{fully_connected_forward.1} parent=1 // pred_fallthru
      _
    // Predicated region
    $region6: #{fully_connected_forward.1} parent=1 // pred_check
      _
    $region7: #{fully_connected_forward.1} parent=1 // pred_check_branch
      %22 = sbr.rel (0) target = $region9
    $region8: #{fully_connected_forward.1} parent=1 // pred_region
      %24 = vsyncadd [#allocation7], 0
      %s25 = sshll.u32 %s1, 4
      %s26 = int_to_ptr.hbm [resolvable:$true] %s25
      %s27 = sshll.u32 [#allocation6], 4
      %s28 = int_to_ptr.vmem [resolvable:$true] %s27
      %33 = dma.hbm_to_vmem [thread:$0]  %s26, 3136, %s28, [#allocation7], 64, 64, 4
    $region9: #{fully_connected_forward.1} parent=1 // pred_fallthru
      _
    // Predicated region
    $region10: #{fully_connected_forward.1} parent=1 // pred_check
      _
    $region11: #{fully_connected_forward.1} parent=1 // pred_check_branch
      %35 = sbr.rel (0) target = $region13
    $region12: #{fully_connected_forward.1} parent=1 // pred_region
      %37 = dma.done [#allocation4], 128
    $region13: #{fully_connected_forward.1} parent=1 // pred_fallthru
      _
    // Predicated region
    $region14: #{fully_connected_forward.1} parent=1 // pred_check
      _
    $region15: #{fully_connected_forward.1} parent=1 // pred_check_branch
      %39 = sbr.rel (0) target = $region17
    $region16: #{fully_connected_forward.1} parent=1 // pred_region
      %41 = dma.done [#allocation7], 3136
    $region17: #{fully_connected_forward.1} parent=1 // pred_fallthru
      _
    %42 = vst [vmem:[#allocation2] sm:$0xff] 0.0
    %v43 = vld [vmem:[#allocation3] sm:$0xff]
    %vm44 = vcmask 80896
    %45 = vst.msk [vmem:[#allocation2] sm:$0xff] %vm44, %v43
    %v46 = vld [vmem:[#allocation2] sm:$0xff]
    %v47 = vpack.c.bf16 %v46, %v46
    %v48 = vld [vmem:[#allocation6] sm:$0x1]
    %v49 = vunpack.c.l.bf16 %v48
    %v50 = vld [vmem:[#allocation6] sm:$0x2]
    %v51 = vunpack.c.l.bf16 %v50
    %v52 = vld [vmem:[#allocation6 + $0x4] sm:$0xf]
    %v53 = vld [vmem:[#allocation6 + $0x8] sm:$0xf]
    %v54 = vld [vmem:[#allocation6 + $0xc] sm:$0xf]
    %v55 = vld [vmem:[#allocation6 + $0x10] sm:$0xf]
    %v56 = vld [vmem:[#allocation6 + $0x14] sm:$0xf]
    %v57 = vld [vmem:[#allocation6 + $0x18] sm:$0xf]
    %v58 = vld [vmem:[#allocation6 + $0x1c] sm:$0xf]
    %v59 = vld [vmem:[#allocation6 + $0x20] sm:$0xf]
    %v60 = vld [vmem:[#allocation6 + $0x24] sm:$0xf]
    %v61 = vld [vmem:[#allocation6 + $0x28] sm:$0xf]
    %v62 = vld [vmem:[#allocation6 + $0x2c] sm:$0xf]
    %v63 = vld [vmem:[#allocation6 + $0x30] sm:$0xf]
    %v64 = vld [vmem:[#allocation6 + $0x34] sm:$0xf]
    %v65 = vld [vmem:[#allocation6 + $0x38] sm:$0xf]
    %v66 = vld [vmem:[#allocation6 + $0x3c] sm:$0xf]
    %v67 = vld [vmem:[#allocation6 + $0x40] sm:$0xf]
    %v68 = vld [vmem:[#allocation6 + $0x44] sm:$0xf]
    %v69 = vld [vmem:[#allocation6 + $0x48] sm:$0xf]
    %v70 = vld [vmem:[#allocation6 + $0x4c] sm:$0xf]
    %v71 = vld [vmem:[#allocation6 + $0x50] sm:$0xf]
    %v72 = vld [vmem:[#allocation6 + $0x54] sm:$0xf]
    %v73 = vld [vmem:[#allocation6 + $0x58] sm:$0xf]
    %v74 = vld [vmem:[#allocation6 + $0x5c] sm:$0xf]
    %v75 = vld [vmem:[#allocation6 + $0x60] sm:$0xf]
    %v76 = vld [vmem:[#allocation6 + $0x64] sm:$0xf]
    %v77 = vld [vmem:[#allocation6 + $0x68] sm:$0xf]
    %v78 = vld [vmem:[#allocation6 + $0x6c] sm:$0xf]
    %v79 = vld [vmem:[#allocation6 + $0x70] sm:$0xf]
    %v80 = vld [vmem:[#allocation6 + $0x74] sm:$0xf]
    %v81 = vld [vmem:[#allocation6 + $0x78] sm:$0xf]
    %v82 = vld [vmem:[#allocation6 + $0x7c] sm:$0xf]
    %v83 = vld [vmem:[#allocation6 + $0x80] sm:$0xf]
    %v84 = vld [vmem:[#allocation6 + $0x84] sm:$0xf]
    %v85 = vld [vmem:[#allocation6 + $0x88] sm:$0xf]
    %v86 = vld [vmem:[#allocation6 + $0x8c] sm:$0xf]
    %v87 = vld [vmem:[#allocation6 + $0x90] sm:$0xf]
    %v88 = vld [vmem:[#allocation6 + $0x94] sm:$0xf]
    %v89 = vld [vmem:[#allocation6 + $0x98] sm:$0xf]
    %v90 = vld [vmem:[#allocation6 + $0x9c] sm:$0xf]
    %v91 = vld [vmem:[#allocation6 + $0xa0] sm:$0xf]
    %v92 = vld [vmem:[#allocation6 + $0xa4] sm:$0xf]
    %v93 = vld [vmem:[#allocation6 + $0xa8] sm:$0xf]
    %v94 = vld [vmem:[#allocation6 + $0xac] sm:$0xf]
    %v95 = vld [vmem:[#allocation6 + $0xb0] sm:$0xf]
    %v96 = vld [vmem:[#allocation6 + $0xb4] sm:$0xf]
    %v97 = vld [vmem:[#allocation6 + $0xb8] sm:$0xf]
    %v98 = vld [vmem:[#allocation6 + $0xbc] sm:$0xf]
    %v99 = vld [vmem:[#allocation6 + $0xc0] sm:$0xf]
    %v100 = vperm.slane %v49, 0
    %v117 = vunpack.c.l.b16 %v52
    %v118 = vunpack.c.l.b16 %v53
    %v119 = vunpack.c.l.b16 %v54
    %v120 = vunpack.c.l.b16 %v55
    %v121 = vunpack.c.l.b16 %v56
    %v122 = vunpack.c.l.b16 %v57
    %v123 = vunpack.c.l.b16 %v58
    %v124 = vunpack.c.l.b16 %v59
    %v125 = vunpack.c.l.b16 %v60
    %v126 = vunpack.c.l.b16 %v61
    %v127 = vunpack.c.l.b16 %v62
    %v128 = vunpack.c.l.b16 %v63
    %v129 = vunpack.c.l.b16 %v64
    %v130 = vunpack.c.l.b16 %v65
    %v131 = vunpack.c.l.b16 %v66
    %v132 = vunpack.c.l.b16 %v67
    %v133 = vpack.c.b16 %v118, %v117
    %v134 = vpack.c.b16 %v120, %v119
    %v135 = vpack.c.b16 %v122, %v121
    %v136 = vpack.c.b16 %v124, %v123
    %v137 = vpack.c.b16 %v126, %v125
    %v138 = vpack.c.b16 %v128, %v127
    %v139 = vpack.c.b16 %v130, %v129
    %v140 = vpack.c.b16 %v132, %v131
    %149 = vmatpush.bf16.msra.mxu0 %v140
    %150 = vmatpush.bf16.msra.mxu0 %v139
    %151 = vmatpush.bf16.msra.mxu0 %v138
    %152 = vmatpush.bf16.msra.mxu0 %v137
    %153 = vmatpush.bf16.msra.mxu0 %v136
    %154 = vmatpush.bf16.msra.mxu0 %v135
    %155 = vmatpush.bf16.msra.mxu0 %v134
    %156 = vmatpush.bf16.msra.mxu0 %v133
    %157 = vmatmul.bf16.gmra.mxu0 %v47
    %v158 = vpop.f32.mrf.mxu0
    %v159 = vadd.f32 %v100, %v158
    %v160 = vpop.f32.mrf.mxu0
    %161 = vdwg.mxu0
    %v162 = vmax.f32 %v159, 0.0
    %v163 = vpack.c.bf16 %v162, %v162
    %v164 = vperm.slane %v49, 1
    %v181 = vunpack.c.l.b16 %v68
    %v182 = vunpack.c.l.b16 %v69
    %v183 = vunpack.c.l.b16 %v70
    %v184 = vunpack.c.l.b16 %v71
    %v185 = vunpack.c.l.b16 %v72
    %v186 = vunpack.c.l.b16 %v73
    %v187 = vunpack.c.l.b16 %v74
    %v188 = vunpack.c.l.b16 %v75
    %v189 = vunpack.c.l.b16 %v76
    %v190 = vunpack.c.l.b16 %v77
    %v191 = vunpack.c.l.b16 %v78
    %v192 = vunpack.c.l.b16 %v79
    %v193 = vunpack.c.l.b16 %v80
    %v194 = vunpack.c.l.b16 %v81
    %v195 = vunpack.c.l.b16 %v82
    %v196 = vunpack.c.l.b16 %v83
    %v197 = vpack.c.b16 %v182, %v181
    %v198 = vpack.c.b16 %v184, %v183
    %v199 = vpack.c.b16 %v186, %v185
    %v200 = vpack.c.b16 %v188, %v187
    %v201 = vpack.c.b16 %v190, %v189
    %v202 = vpack.c.b16 %v192, %v191
    %v203 = vpack.c.b16 %v194, %v193
    %v204 = vpack.c.b16 %v196, %v195
    %213 = vmatpush.bf16.msra.mxu0 %v204
    %214 = vmatpush.bf16.msra.mxu0 %v203
    %215 = vmatpush.bf16.msra.mxu0 %v202
    %216 = vmatpush.bf16.msra.mxu0 %v201
    %217 = vmatpush.bf16.msra.mxu0 %v200
    %218 = vmatpush.bf16.msra.mxu0 %v199
    %219 = vmatpush.bf16.msra.mxu0 %v198
    %220 = vmatpush.bf16.msra.mxu0 %v197
    %221 = vmatmul.bf16.gmra.mxu0 %v163
    %v222 = vpop.f32.mrf.mxu0
    %v223 = vadd.f32 %v164, %v222
    %v224 = vpop.f32.mrf.mxu0
    %225 = vdwg.mxu0
    %v226 = vmax.f32 %v223, 0.0
    %v227 = vpack.c.bf16 %v226, %v226
    %v228 = vperm.slane %v51, 2
    %v245 = vunpack.c.l.b16 %v84
    %v246 = vunpack.c.l.b16 %v85
    %v247 = vunpack.c.l.b16 %v86
    %v248 = vunpack.c.l.b16 %v87
    %v249 = vunpack.c.l.b16 %v88
    %v250 = vunpack.c.l.b16 %v89
    %v251 = vunpack.c.l.b16 %v90
    %v252 = vunpack.c.l.b16 %v91
    %v253 = vunpack.c.l.b16 %v92
    %v254 = vunpack.c.l.b16 %v93
    %v255 = vunpack.c.l.b16 %v94
    %v256 = vunpack.c.l.b16 %v95
    %v257 = vunpack.c.l.b16 %v96
    %v258 = vunpack.c.l.b16 %v97
    %v259 = vunpack.c.l.b16 %v98
    %v260 = vunpack.c.l.b16 %v99
    %v261 = vpack.c.b16 %v246, %v245
    %v262 = vpack.c.b16 %v248, %v247
    %v263 = vpack.c.b16 %v250, %v249
    %v264 = vpack.c.b16 %v252, %v251
    %v265 = vpack.c.b16 %v254, %v253
    %v266 = vpack.c.b16 %v256, %v255
    %v267 = vpack.c.b16 %v258, %v257
    %v268 = vpack.c.b16 %v260, %v259
    %277 = vmatpush.bf16.msra.mxu0 %v268
    %278 = vmatpush.bf16.msra.mxu0 %v267
    %279 = vmatpush.bf16.msra.mxu0 %v266
    %280 = vmatpush.bf16.msra.mxu0 %v265
    %281 = vmatpush.bf16.msra.mxu0 %v264
    %282 = vmatpush.bf16.msra.mxu0 %v263
    %283 = vmatpush.bf16.msra.mxu0 %v262
    %284 = vmatpush.bf16.msra.mxu0 %v261
    %285 = vmatmul.bf16.gmra.mxu0 %v227
    %v286 = vpop.f32.mrf.mxu0
    %v287 = vadd.f32 %v228, %v286
    %v288 = vpop.f32.mrf.mxu0
    %289 = vdwg.mxu0
    %v290 = vsub.f32 0.0, %v287
    %v291 = vmul.f32 %v290, 1.442695
    %v292 = vpow.pop %v291
    %v293 = vadd.f32 %v292, 1.0
    %v294 = vrcp.pop %v293
    %295 = vst.msk [vmem:[#allocation8] sm:$0xff] %vm44, %v294
    // Predicated region
    $region18: #{fully_connected_forward.1} parent=1 // pred_check
      _
    $region19: #{fully_connected_forward.1} parent=1 // pred_check_branch
      %297 = sbr.rel (0) target = $region21
    $region20: #{fully_connected_forward.1} parent=1 // pred_region
      %299 = vsyncadd [#allocation5], 0
      %s301 = sshll.u32 [#allocation8], 4
      %s302 = int_to_ptr.vmem [resolvable:$true] %s301
      %s303 = sshll.u32 %s2, 4
      %s304 = int_to_ptr.hbm [resolvable:$true] %s303
      %306 = dma.vmem_to_hbm [thread:$0]  %s302, 128, %s304, [#allocation5]
    $region21: #{fully_connected_forward.1} parent=1 // pred_fallthru
      _
    // Predicated region
    $region22: #{fully_connected_forward.1} parent=1 // pred_check
      _
    $region23: #{fully_connected_forward.1} parent=1 // pred_check_branch
      %308 = sbr.rel (0) target = $region25
    $region24: #{fully_connected_forward.1} parent=1 // pred_region
      %310 = dma.done [#allocation5], 128
    $region25: #{fully_connected_forward.1} parent=1 // pred_fallthru
      _
    %311 = vsyncpa [#allocation4], 1
    %312 = vsyncpa [#allocation7], 1
    %313 = vsyncpa [#allocation5], 1

</llo_original>
